<compile_context>
chip_gen: v6e
topology: v6e:2x2x1
jax: 0.10.0
libtpu: 0.0.40
codegen_flags: <defaults>
</compile_context>

<pallas_src>
import functools

import jax
import jax.numpy as jnp
from jax.experimental import pallas as pl
from jax.experimental.pallas import tpu as pltpu

_LANES = 128
_MAX_BLOCK_ROWS = 2048   # 2048 * 128 * 4 B = 1 MiB per f32 input tile
_OUTER = 2               # leading "parallel" grid axis (2 TensorCores on v7x)


def _masked_l1_kernel(pred_ref, target_ref, sum_ref, cnt_ref, acc_sum, acc_cnt,
                      *, rows, inner, block_rows):
    i = pl.program_id(0)   # outer ("parallel") chunk
    k = pl.program_id(1)   # inner reduction step

    @pl.when(k == 0)
    def _():
        acc_sum[...] = jnp.zeros_like(acc_sum)
        acc_cnt[...] = jnp.zeros_like(acc_cnt)

    # Inputs stream from HBM in their native dtype; upcast in-register.
    t = target_ref[...].astype(jnp.float32)
    p = pred_ref[...].astype(jnp.float32)

    # Row mask for the ragged final block (and for the fully out-of-range
    # steps of the last chunk).  Lane-pad elements (when present) have
    # target == 0 and are already excluded by the (target > 0) mask.
    row0 = (i * inner + k) * block_rows
    row_ids = row0 + jax.lax.broadcasted_iota(jnp.int32, t.shape, 0)
    valid = (t > 0) & (row_ids < rows)

    # Pure VPU elementwise accumulation: no per-step cross-lane reduce.
    acc_sum[...] += jnp.where(valid, jnp.abs(t - p), 0.0)
    acc_cnt[...] += valid.astype(jnp.int32)

    @pl.when(k == pl.num_programs(1) - 1)
    def _():
        # Single cross-lane/sublane reduce per outer chunk.
        sum_ref[...] = jnp.sum(acc_sum[...]).reshape(1, 1, 1)
        cnt_ref[...] = jnp.sum(acc_cnt[...].astype(jnp.float32)).reshape(1, 1, 1)


@jax.jit
def masked_l1_loss(pred, target, weight=None):
    # `weight` is accepted for API parity but ignored, exactly like the
    # original PyTorch module's forward.
    assert pred.ndim == target.ndim, "inconsistent dimensions"
    assert pred.shape == target.shape

    n = pred.size
    pred_f = pred.reshape(-1)      # flatten is layout-only, no HBM copy
    target_f = target.reshape(-1)

    # Pad only if the flat length is not a multiple of 128 lanes (pad value 0
    # is excluded by the target > 0 mask).  For typical NCHW tensors this
    # branch is skipped entirely, so there is no extra HBM pass.
    pad = (-n) % _LANES
    if pad:
        pred_f = jnp.pad(pred_f, (0, pad))
        target_f = jnp.pad(target_f, (0, pad))
    rows = (n + pad) // _LANES

    pred2d = pred_f.reshape(rows, _LANES)
    target2d = target_f.reshape(rows, _LANES)

    # Tile sizing: up to 1 MiB (f32) per input tile, clamped for small inputs,
    # always a multiple of 8 sublanes.
    block_rows = min(_MAX_BLOCK_ROWS, ((rows + 7) // 8) * 8)
    nblocks = pl.cdiv(rows, block_rows)
    inner = pl.cdiv(nblocks, _OUTER)

    def in_map(i, k):
        # Clamp so the trailing (fully masked) steps of the last chunk re-read
        # the final block instead of indexing past the array.
        return (jnp.minimum(i * inner + k, nblocks - 1), 0)

    kernel = functools.partial(
        _masked_l1_kernel, rows=rows, inner=inner, block_rows=block_rows)

    partial_sum, partial_cnt = pl.pallas_call(
        kernel,
        out_shape=(
            jax.ShapeDtypeStruct((_OUTER, 1, 1), jnp.float32),
            jax.ShapeDtypeStruct((_OUTER, 1, 1), jnp.float32),
        ),
        grid_spec=pltpu.PrefetchScalarGridSpec(
            num_scalar_prefetch=0,
            grid=(_OUTER, inner),
            in_specs=[
                pl.BlockSpec((block_rows, _LANES), in_map),
                pl.BlockSpec((block_rows, _LANES), in_map),
            ],
            out_specs=(
                pl.BlockSpec((1, 1, 1), lambda i, k: (i, 0, 0)),
                pl.BlockSpec((1, 1, 1), lambda i, k: (i, 0, 0)),
            ),
            scratch_shapes=[
                pltpu.VMEM((block_rows, _LANES), jnp.float32),
                pltpu.VMEM((block_rows, _LANES), jnp.int32),
            ],
        ),
        compiler_params=pltpu.CompilerParams(
            dimension_semantics=("parallel", "arbitrary")),
    )(pred2d, target2d)

    # Combine per-chunk partials; 0/0 -> NaN matches torch's empty mean.
    return jnp.sum(partial_sum) / jnp.sum(partial_cnt)


if __name__ == "__main__":
    key = jax.random.PRNGKey(0)
    k_pred, k_target = jax.random.split(key)

    # NCHW like the PyTorch module would receive (e.g. depth maps).
    shape = (2, 4, 16, 16)
    pred = jax.random.normal(k_pred, shape, dtype=jnp.float32)
    # target: mix of positive values and zeros/negatives so the mask matters
    target = jax.random.normal(k_target, shape, dtype=jnp.float32)

    loss = masked_l1_loss(pred, target)
    jax.block_until_ready(loss)

    # reference check in plain JAX
    mask = target > 0
    ref = jnp.sum(jnp.where(mask, jnp.abs(target - pred), 0.0)) / jnp.sum(
        mask.astype(jnp.float32))
    assert jnp.allclose(loss, ref, rtol=1e-5, atol=1e-6), (loss, ref)

    print("KERNEL_OK")
</pallas_src>

<mosaic_0001>
module attributes {stable_mosaic.version = 11 : i64} {
  func.func @_masked_l1_kernel(%arg0: i32, %arg1: i32, %arg2: memref<16x128xf32, #tpu.memory_space<vmem>>, %arg3: memref<16x128xf32, #tpu.memory_space<vmem>>, %arg4: memref<1x1x1xf32, #tpu.memory_space<vmem>>, %arg5: memref<1x1x1xf32, #tpu.memory_space<vmem>>, %arg6: memref<16x128xf32, #tpu.memory_space<vmem>>, %arg7: memref<16x128xi32, #tpu.memory_space<vmem>>) attributes {dimension_semantics = [#tpu.dimension_semantics<parallel>, #tpu.dimension_semantics<arbitrary>], iteration_bounds = array<i64: 2, 1>, scalar_prefetch = 0 : i64, scratch_operands = 2 : i64, tpu.core_type = #tpu.core_type<tc>, window_params = [{transform_indices = @transform_0, window_bounds = array<i64: 16, 128>}, {transform_indices = @transform_1, window_bounds = array<i64: 16, 128>}, {transform_indices = @transform_2, window_bounds = array<i64: 1, 1, 1>}, {transform_indices = @transform_3, window_bounds = array<i64: 1, 1, 1>}]} {
    %c0_i32 = arith.constant 0 : i32
    %0 = arith.cmpi eq, %arg1, %c0_i32 : i32
    %1 = arith.extui %0 : i1 to i32
    %c0_i32_0 = arith.constant 0 : i32
    %2 = arith.cmpi ne, %1, %c0_i32_0 : i32
    scf.if %2 {
      %cst_16 = arith.constant 0.000000e+00 : f32
      %30 = vector.broadcast %cst_16 : f32 to vector<16x128xf32>
      %c0_17 = arith.constant 0 : index
      %c0_18 = arith.constant 0 : index
      %31 = vector.load %arg6[%c0_17, %c0_18] : memref<16x128xf32, #tpu.memory_space<vmem>>, vector<16x128xf32>
      tpu.vector_store %arg6[%c0_17, %c0_18], %30 {strides = array<i32>} : memref<16x128xf32, #tpu.memory_space<vmem>>, vector<16x128xf32>,
      %c0_i32_19 = arith.constant 0 : i32
      %32 = vector.broadcast %c0_i32_19 : i32 to vector<16x128xi32>
      %c0_20 = arith.constant 0 : index
      %c0_21 = arith.constant 0 : index
      %33 = vector.load %arg7[%c0_20, %c0_21] : memref<16x128xi32, #tpu.memory_space<vmem>>, vector<16x128xi32>
      tpu.vector_store %arg7[%c0_20, %c0_21], %32 {strides = array<i32>} : memref<16x128xi32, #tpu.memory_space<vmem>>, vector<16x128xi32>,
    } else {
    }
    %c0 = arith.constant 0 : index
    %c0_1 = arith.constant 0 : index
    %3 = vector.load %arg3[%c0, %c0_1] : memref<16x128xf32, #tpu.memory_space<vmem>>, vector<16x128xf32>
    %c0_2 = arith.constant 0 : index
    %c0_3 = arith.constant 0 : index
    %4 = vector.load %arg2[%c0_2, %c0_3] : memref<16x128xf32, #tpu.memory_space<vmem>>, vector<16x128xf32>
    %c1_i32 = arith.constant 1 : i32
    %5 = arith.muli %arg0, %c1_i32 : i32
    %6 = arith.addi %5, %arg1 : i32
    %c16_i32 = arith.constant 16 : i32
    %7 = arith.muli %6, %c16_i32 : i32
    %8 = tpu.iota {dimensions = array<i32: 0>} : vector<16x128xi32>
    %9 = vector.broadcast %7 : i32 to vector<16x128xi32>
    %10 = arith.addi %9, %8 : vector<16x128xi32>
    %cst = arith.constant 0.000000e+00 : f32
    %11 = vector.broadcast %cst : f32 to vector<16x128xf32>
    %12 = arith.cmpf ogt, %3, %11 : vector<16x128xf32>
    %c16_i32_4 = arith.constant 16 : i32
    %13 = vector.broadcast %c16_i32_4 : i32 to vector<16x128xi32>
    %14 = arith.cmpi slt, %10, %13 : vector<16x128xi32>
    %15 = arith.andi %12, %14 : vector<16x128xi1>
    %c0_5 = arith.constant 0 : index
    %c0_6 = arith.constant 0 : index
    %16 = vector.load %arg6[%c0_5, %c0_6] : memref<16x128xf32, #tpu.memory_space<vmem>>, vector<16x128xf32>
    %17 = arith.subf %3, %4 : vector<16x128xf32>
    %18 = math.absf %17 : vector<16x128xf32>
    %cst_7 = arith.constant 0.000000e+00 : f32
    %19 = vector.broadcast %cst_7 : f32 to vector<16x128xf32>
    %20 = arith.select %15, %18, %19 : vector<16x128xi1>, vector<16x128xf32>
    %21 = arith.addf %16, %20 : vector<16x128xf32>
    %c0_8 = arith.constant 0 : index
    %c0_9 = arith.constant 0 : index
    %22 = vector.load %arg6[%c0_8, %c0_9] : memref<16x128xf32, #tpu.memory_space<vmem>>, vector<16x128xf32>
    tpu.vector_store %arg6[%c0_8, %c0_9], %21 {strides = array<i32>} : memref<16x128xf32, #tpu.memory_space<vmem>>, vector<16x128xf32>,
    %c0_10 = arith.constant 0 : index
    %c0_11 = arith.constant 0 : index
    %23 = vector.load %arg7[%c0_10, %c0_11] : memref<16x128xi32, #tpu.memory_space<vmem>>, vector<16x128xi32>
    %24 = arith.extui %15 : vector<16x128xi1> to vector<16x128xi32>
    %25 = arith.addi %23, %24 : vector<16x128xi32>
    %c0_12 = arith.constant 0 : index
    %c0_13 = arith.constant 0 : index
    %26 = vector.load %arg7[%c0_12, %c0_13] : memref<16x128xi32, #tpu.memory_space<vmem>>, vector<16x128xi32>
    tpu.vector_store %arg7[%c0_12, %c0_13], %25 {strides = array<i32>} : memref<16x128xi32, #tpu.memory_space<vmem>>, vector<16x128xi32>,
    %c0_i32_14 = arith.constant 0 : i32
    %27 = arith.cmpi eq, %arg1, %c0_i32_14 : i32
    %28 = arith.extui %27 : i1 to i32
    %c0_i32_15 = arith.constant 0 : i32
    %29 = arith.cmpi ne, %28, %c0_i32_15 : i32
    scf.if %29 {
      %c0_16 = arith.constant 0 : index
      %c0_17 = arith.constant 0 : index
      %30 = vector.load %arg6[%c0_16, %c0_17] : memref<16x128xf32, #tpu.memory_space<vmem>>, vector<16x128xf32>
      %31 = vector.shape_cast %30 : vector<16x128xf32> to vector<1x16x128xf32>
      %cst_18 = arith.constant dense<0.000000e+00> : vector<1xf32>
      %32 = vector.multi_reduction <add>, %31, %cst_18 [1, 2] : vector<1x16x128xf32> to vector<1xf32>
      %33 = vector.shape_cast %32 : vector<1xf32> to vector<1x1x1xf32>
      %34 = vector.extract %33[0, 0, 0] : f32 from vector<1x1x1xf32>
      %35 = vector.broadcast %34 : f32 to vector<1x1x1xf32>
      %c0_19 = arith.constant 0 : index
      %c0_20 = arith.constant 0 : index
      %c0_21 = arith.constant 0 : index
      %36 = vector.load %arg4[%c0_19, %c0_20, %c0_21] : memref<1x1x1xf32, #tpu.memory_space<vmem>>, vector<1x1x1xf32>
      tpu.vector_store %arg4[%c0_19, %c0_20, %c0_21], %35 {strides = array<i32>} : memref<1x1x1xf32, #tpu.memory_space<vmem>>, vector<1x1x1xf32>,
      %c0_22 = arith.constant 0 : index
      %c0_23 = arith.constant 0 : index
      %37 = vector.load %arg7[%c0_22, %c0_23] : memref<16x128xi32, #tpu.memory_space<vmem>>, vector<16x128xi32>
      %38 = arith.sitofp %37 : vector<16x128xi32> to vector<16x128xf32>
      %39 = vector.shape_cast %38 : vector<16x128xf32> to vector<1x16x128xf32>
      %cst_24 = arith.constant dense<0.000000e+00> : vector<1xf32>
      %40 = vector.multi_reduction <add>, %39, %cst_24 [1, 2] : vector<1x16x128xf32> to vector<1xf32>
      %41 = vector.shape_cast %40 : vector<1xf32> to vector<1x1x1xf32>
      %42 = vector.extract %41[0, 0, 0] : f32 from vector<1x1x1xf32>
      %43 = vector.broadcast %42 : f32 to vector<1x1x1xf32>
      %c0_25 = arith.constant 0 : index
      %c0_26 = arith.constant 0 : index
      %c0_27 = arith.constant 0 : index
      %44 = vector.load %arg5[%c0_25, %c0_26, %c0_27] : memref<1x1x1xf32, #tpu.memory_space<vmem>>, vector<1x1x1xf32>
      tpu.vector_store %arg5[%c0_25, %c0_26, %c0_27], %43 {strides = array<i32>} : memref<1x1x1xf32, #tpu.memory_space<vmem>>, vector<1x1x1xf32>,
    } else {
    }
    return
  }
  func.func @transform_0(%arg0: i32, %arg1: i32) -> (i32, i32) {
    %c1_i32 = arith.constant 1 : i32
    %0 = arith.muli %arg0, %c1_i32 : i32
    %1 = arith.addi %0, %arg1 : i32
    %c0_i32 = arith.constant 0 : i32
    %2 = arith.minsi %1, %c0_i32 : i32
    %c0_i32_0 = arith.constant 0 : i32
    %c0_i32_1 = arith.constant 0 : i32
    return %2, %c0_i32_0 : i32, i32
  }
  func.func @transform_1(%arg0: i32, %arg1: i32) -> (i32, i32) {
    %c1_i32 = arith.constant 1 : i32
    %0 = arith.muli %arg0, %c1_i32 : i32
    %1 = arith.addi %0, %arg1 : i32
    %c0_i32 = arith.constant 0 : i32
    %2 = arith.minsi %1, %c0_i32 : i32
    %c0_i32_0 = arith.constant 0 : i32
    %c0_i32_1 = arith.constant 0 : i32
    return %2, %c0_i32_0 : i32, i32
  }
  func.func @transform_2(%arg0: i32, %arg1: i32) -> (i32, i32, i32) {
    %c0_i32 = arith.constant 0 : i32
    %c0_i32_0 = arith.constant 0 : i32
    %c0_i32_1 = arith.constant 0 : i32
    return %arg0, %c0_i32, %c0_i32_0 : i32, i32, i32
  }
  func.func @transform_3(%arg0: i32, %arg1: i32) -> (i32, i32, i32) {
    %c0_i32 = arith.constant 0 : i32
    %c0_i32_0 = arith.constant 0 : i32
    %c0_i32_1 = arith.constant 0 : i32
    return %arg0, %c0_i32, %c0_i32_0 : i32, i32, i32
  }
}

</mosaic_0001>

<llo_original>
// kernel: masked_l1_loss.1
$region0: #{masked_l1_loss.1}
  #allocation0 [shape = 'u32[]', space=smem, size = 0x4, offset = 0x4, fixed_abs, tag = 'smem constant byte address 0x4 - core index']
  #allocation1 [shape = 'u32[144,128]{1,0:T(1,128)}', space=vmem, size = 0x12000, scoped, tag = 'internal scratch']
  #allocation2 [shape = 'f32[16,128]{1,0:T(8,128)}', space=vmem, size = 0x2000, scoped, tag = 'scratch operand']
  #allocation3 [shape = 's32[16,128]{1,0:T(8,128)}', space=vmem, size = 0x2000, scoped, tag = 'scratch operand']
  %s0 = inlined_call_operand.vmem [shape: f32[16,128], index: 0, kind: input, shape index: {}]
  %s1 = inlined_call_operand.vmem [shape: f32[16,128], index: 1, kind: input, shape index: {}]
  %s2 = inlined_call_operand.vmem [shape: f32[2,1,1], index: 2, kind: output, shape index: {0}]
  %s3 = inlined_call_operand.vmem [shape: f32[2,1,1], index: 3, kind: output, shape index: {1}]
  %4 = xla_tuple %s2, %s3
  %s5 = sld [smem:[#allocation0]]
  $region57: #{masked_l1_loss.1} parent=0
    _
  %s7 = ssub.s32 1, %s5
  %s8 = scalar_select 0, %s7, %s5
  loop: start=0, step=1, limit=4
  $region2: #{masked_l1_loss.1} parent=0 // loop_pre_header
    _
  $region3: #{masked_l1_loss.1} parent=0 // loop_header
    %s10 = sphi 0, %s14
    %p11 = scmp.ge.s32.totalorder %s10, 4
    %s17 = sphi 0, %s29
    %s18 = sphi 0, %s25
    %s19 = sphi 0, %s17
    %s20 = sphi 0, %s18
    %s21 = sphi 0, %s19
    %s22 = sphi 0, %s20
    %s38 = sphi 0, %s40
    %s41 = sphi 0, %s38
    %s42 = sphi 0, %s41
    %s58 = sphi 0, %s42
    %s70 = sphi 0, %s72
    %s73 = sphi 0, %s70
    %s74 = sphi 0, %s73
    %s90 = sphi 0, %s74
    %s96 = sphi 0, %s98
    %s99 = sphi 0, %s96
    %s100 = sphi 0, %s99
    %s116 = sphi 0, %s100
    %s122 = sphi 0, %s124
    %s125 = sphi 0, %s122
    %s126 = sphi 0, %s125
    %s142 = sphi 0, %s126
  $region4: #{masked_l1_loss.1} parent=0 // loop_header_branch
    %13 = sbr.rel (%p11) target = $region8
  $region5: #{masked_l1_loss.1} parent=0 // loop_body
    %s15 = ssub.s32 %s10, 1
    %s16 = ssub.s32 %s10, 2
    %s23 = sadd.s32 1, %s18
    %p24 = scmp.ge.s32.totalorder %s23, 1
    %s25 = scalar_select %p24, 0, %s23
    %s26 = sadd.s32 1, %s17
    %s27 = scalar_select %p24, %s26, %s17
    %p28 = scmp.ge.s32.totalorder %s27, 2
    %s29 = scalar_select %p28, 0, %s27
    %s30 = sadd.s32 %s17, %s18
    %p31 = scmp.lt.s32.totalorder %s30, 0
    %s32 = scalar_select %p31, %s30, 0
    %s33 = sadd.s32 %s29, %s25
    %p34 = scmp.lt.s32.totalorder %s33, 0
    %s35 = scalar_select %p34, %s33, 0
    %s36 = ssub.s32 %s32, %s35
    %p37 = scmp.eq.s32.totalorder %s36, 0
    %s39 = sadd.s32 %s38, 1
    %s40 = scalar_select %p37, %s38, %s39
    %p43 = pneg %p37
    %p44 = scmp.eq.s32.totalorder %s10, 1
    %p45 = por %p43, %p44
    %p46 = scmp.ne.s32.totalorder %s38, %s41
    %p47 = scmp.eq.s32.totalorder %s10, 0
    %p48 = por %p46, %p47
    %p49 = scmp.ne.s32.totalorder %s38, %s41
    %p50 = scmp.eq.s32.totalorder %s15, 1
    %p51 = por %p49, %p50
    %p52 = scmp.ne.s32.totalorder %s41, %s42
    %p53 = scmp.eq.s32.totalorder %s15, 0
    %p54 = por %p52, %p53
    %p55 = scmp.ne.s32.totalorder %s41, %s42
    %p56 = scmp.eq.s32.totalorder %s16, 1
    %p57 = por %p55, %p56
    %p59 = scmp.ne.s32.totalorder %s42, %s58
    %p60 = scmp.eq.s32.totalorder %s16, 0
    %p61 = por %p59, %p60
    %s62 = sadd.s32 %s17, %s18
    %p63 = scmp.lt.s32.totalorder %s62, 0
    %s64 = scalar_select %p63, %s62, 0
    %s65 = sadd.s32 %s29, %s25
    %p66 = scmp.lt.s32.totalorder %s65, 0
    %s67 = scalar_select %p66, %s65, 0
    %s68 = ssub.s32 %s64, %s67
    %p69 = scmp.eq.s32.totalorder %s68, 0
    %s71 = sadd.s32 %s70, 1
    %s72 = scalar_select %p69, %s70, %s71
    %p75 = pneg %p69
    %p76 = scmp.eq.s32.totalorder %s10, 1
    %p77 = por %p75, %p76
    %p78 = scmp.ne.s32.totalorder %s70, %s73
    %p79 = scmp.eq.s32.totalorder %s10, 0
    %p80 = por %p78, %p79
    %p81 = scmp.ne.s32.totalorder %s70, %s73
    %p82 = scmp.eq.s32.totalorder %s15, 1
    %p83 = por %p81, %p82
    %p84 = scmp.ne.s32.totalorder %s73, %s74
    %p85 = scmp.eq.s32.totalorder %s15, 0
    %p86 = por %p84, %p85
    %p87 = scmp.ne.s32.totalorder %s73, %s74
    %p88 = scmp.eq.s32.totalorder %s16, 1
    %p89 = por %p87, %p88
    %p91 = scmp.ne.s32.totalorder %s74, %s90
    %p92 = scmp.eq.s32.totalorder %s16, 0
    %p93 = por %p91, %p92
    %s94 = ssub.s32 %s17, %s29
    %p95 = scmp.eq.s32.totalorder %s94, 0
    %s97 = sadd.s32 %s96, 1
    %s98 = scalar_select %p95, %s96, %s97
    %p101 = pneg %p95
    %p102 = scmp.eq.s32.totalorder %s10, 1
    %p103 = por %p101, %p102
    %p104 = scmp.ne.s32.totalorder %s96, %s99
    %p105 = scmp.eq.s32.totalorder %s10, 0
    %p106 = por %p104, %p105
    %p107 = scmp.ne.s32.totalorder %s96, %s99
    %p108 = scmp.eq.s32.totalorder %s15, 1
    %p109 = por %p107, %p108
    %p110 = scmp.ne.s32.totalorder %s99, %s100
    %p111 = scmp.eq.s32.totalorder %s15, 0
    %p112 = por %p110, %p111
    %p113 = scmp.ne.s32.totalorder %s99, %s100
    %p114 = scmp.eq.s32.totalorder %s16, 1
    %p115 = por %p113, %p114
    %p117 = scmp.ne.s32.totalorder %s100, %s116
    %p118 = scmp.eq.s32.totalorder %s16, 0
    %p119 = por %p117, %p118
    %s120 = ssub.s32 %s17, %s29
    %p121 = scmp.eq.s32.totalorder %s120, 0
    %s123 = sadd.s32 %s122, 1
    %s124 = scalar_select %p121, %s122, %s123
    %p127 = pneg %p121
    %p128 = scmp.eq.s32.totalorder %s10, 1
    %p129 = por %p127, %p128
    %p130 = scmp.ne.s32.totalorder %s122, %s125
    %p131 = scmp.eq.s32.totalorder %s10, 0
    %p132 = por %p130, %p131
    %p133 = scmp.ne.s32.totalorder %s122, %s125
    %p134 = scmp.eq.s32.totalorder %s15, 1
    %p135 = por %p133, %p134
    %p136 = scmp.ne.s32.totalorder %s125, %s126
    %p137 = scmp.eq.s32.totalorder %s15, 0
    %p138 = por %p136, %p137
    %p139 = scmp.ne.s32.totalorder %s125, %s126
    %p140 = scmp.eq.s32.totalorder %s16, 1
    %p141 = por %p139, %p140
    %p143 = scmp.ne.s32.totalorder %s126, %s142
    %p144 = scmp.eq.s32.totalorder %s16, 0
    %p145 = por %p143, %p144
    %p146 = scmp.le.s32.totalorder 1, %s10
    %p147 = scmp.lt.s32.totalorder %s10, 3
    %p148 = pnand %p146, %p147
    %p149 = pneg %p148
    // Predicated region
    $region9: #{masked_l1_loss.1} parent=5 // pred_check
      _
    $region10: #{masked_l1_loss.1} parent=5 // pred_check_branch
      %151 = sbr.rel (%p148) target = $region12
    $region11: #{masked_l1_loss.1} parent=5 // pred_region
      %s152 = ssub.s32 %s10, 1
    $region12: #{masked_l1_loss.1} parent=5 // pred_fallthru
      _
    %p153 = scmp.lt.s32.totalorder %s10, 2
    // Predicated region
    $region13: #{masked_l1_loss.1} parent=5 // pred_check
      %p154 = pneg %p153
    $region14: #{masked_l1_loss.1} parent=5 // pred_check_branch
      %156 = sbr.rel (%p154) target = $region16
    $region15: #{masked_l1_loss.1} parent=5 // pred_region
      // Predicated region
      $region17: #{masked_l1_loss.1} parent=15 // pred_check
        %p157 = pneg %p48
      $region18: #{masked_l1_loss.1} parent=15 // pred_check_branch
        %159 = sbr.rel (%p157) target = $region20
      $region19: #{masked_l1_loss.1} parent=15 // pred_region
        %s160 = sadd.s32 %s17, %s18
        %p161 = scmp.lt.s32.totalorder %s160, 0
        %s162 = scalar_select %p161, %s160, 0
        %s163 = smul.u32 2, %s162
        %p164 = scmp.lt.s32.totalorder %s163, 1
        %s165 = scalar_select %p164, %s163, 1
        %s166 = smul.addr %s165, 8
        %s167 = scalar_lea.vmem %s0, %s166
        %s168 = sadd.s32 %s17, %s18
        %p169 = scmp.lt.s32.totalorder %s168, 0
        %s170 = scalar_select %p169, %s168, 0
        %s171 = smul.u32 2, %s170
      $region20: #{masked_l1_loss.1} parent=15 // pred_fallthru
        _
      // Predicated region
      $region21: #{masked_l1_loss.1} parent=15 // pred_check
        %p172 = pneg %p80
      $region22: #{masked_l1_loss.1} parent=15 // pred_check_branch
        %174 = sbr.rel (%p172) target = $region24
      $region23: #{masked_l1_loss.1} parent=15 // pred_region
        %s175 = sadd.s32 %s17, %s18
        %p176 = scmp.lt.s32.totalorder %s175, 0
        %s177 = scalar_select %p176, %s175, 0
        %s178 = smul.u32 2, %s177
        %p179 = scmp.lt.s32.totalorder %s178, 1
        %s180 = scalar_select %p179, %s178, 1
        %s181 = smul.addr %s180, 8
        %s182 = scalar_lea.vmem %s1, %s181
        %s183 = sadd.s32 %s17, %s18
        %p184 = scmp.lt.s32.totalorder %s183, 0
        %s185 = scalar_select %p184, %s183, 0
        %s186 = smul.u32 2, %s185
      $region24: #{masked_l1_loss.1} parent=15 // pred_fallthru
        _
    $region16: #{masked_l1_loss.1} parent=5 // pred_fallthru
      _
    %p187 = scmp.le.s32.totalorder 1, %s10
    %p188 = scmp.lt.s32.totalorder %s10, 3
    %p189 = pnand %p187, %p188
    %p190 = pneg %p189
    // Predicated region
    $region25: #{masked_l1_loss.1} parent=5 // pred_check
      _
    $region26: #{masked_l1_loss.1} parent=5 // pred_check_branch
      %192 = sbr.rel (%p189) target = $region28
    $region27: #{masked_l1_loss.1} parent=5 // pred_region
      %s193 = ssub.s32 %s10, 1
      %s194 = sadd.s32 %s19, %s20
      %p195 = scmp.lt.s32.totalorder %s194, 0
      %s196 = scalar_select %p195, %s194, 0
      %s197 = smul.u32 2, %s196
      %p198 = scmp.lt.s32.totalorder %s197, 1
      %s199 = scalar_select %p198, %s197, 1
      %s200 = smul.addr %s199, 8
      %s201 = scalar_lea.vmem %s0, %s200
      %p202 = pneg %p54
      %p203 = pneg %p51
      %s204 = sadd.s32 %s19, %s20
      %p205 = scmp.lt.s32.totalorder %s204, 0
      %s206 = scalar_select %p205, %s204, 0
      %s207 = smul.u32 2, %s206
      %p208 = scmp.lt.s32.totalorder %s207, 1
      %s209 = scalar_select %p208, %s207, 1
      %s210 = smul.addr %s209, 8
      %s211 = scalar_lea.vmem %s1, %s210
      %p212 = pneg %p86
      %p213 = pneg %p83
      %p214 = pneg %p112
      %p215 = pneg %p109
      %p216 = scmp.lt.s32.totalorder %s19, 1
      %s217 = scalar_select %p216, %s19, 1
      %s218 = scalar_lea.vmem %s2, %s217
      %p219 = pneg %p138
      %p220 = pneg %p135
      %p221 = scmp.lt.s32.totalorder %s19, 1
      %s222 = scalar_select %p221, %s19, 1
      %s223 = scalar_lea.vmem %s3, %s222
      %s224 = sadd.s32 %s19, %s20
      %p225 = scmp.lt.s32.totalorder %s224, 0
      %s226 = scalar_select %p225, %s224, 0
      %s227 = smul.u32 2, %s226
      %p228 = scmp.lt.s32.totalorder %s227, 1
      %s229 = scalar_select %p228, %s227, 1
      %s230 = smul.addr %s229, 8
      %s231 = scalar_lea.vmem %s0, %s230
      %s232 = sadd.s32 %s19, %s20
      %p233 = scmp.lt.s32.totalorder %s232, 0
      %s234 = scalar_select %p233, %s232, 0
      %s235 = smul.u32 2, %s234
      %s236 = sadd.s32 %s19, %s20
      %p237 = scmp.lt.s32.totalorder %s236, 0
      %s238 = scalar_select %p237, %s236, 0
      %s239 = smul.u32 2, %s238
      %p240 = scmp.lt.s32.totalorder %s239, 1
      %s241 = scalar_select %p240, %s239, 1
      %s242 = smul.addr %s241, 8
      %s243 = scalar_lea.vmem %s1, %s242
      %s244 = sadd.s32 %s19, %s20
      %p245 = scmp.lt.s32.totalorder %s244, 0
      %s246 = scalar_select %p245, %s244, 0
      %s247 = smul.u32 2, %s246
      %p248 = scmp.lt.s32.totalorder %s19, 1
      %s249 = scalar_select %p248, %s19, 1
      %s250 = scalar_lea.vmem %s2, %s249
      %p251 = scmp.lt.s32.totalorder %s19, 1
      %s252 = scalar_select %p251, %s19, 1
      %s253 = scalar_lea.vmem %s3, %s252
      %p254 = scmp.eq.s32.totalorder %s20, 0
      // Predicated region
      $region29: #{masked_l1_loss.1} parent=27 // pred_check
        %p255 = pneg %p254
      $region30: #{masked_l1_loss.1} parent=27 // pred_check_branch
        %257 = sbr.rel (%p255) target = $region32
      $region31: #{masked_l1_loss.1} parent=27 // pred_region
        %258 = vst [vmem:[#allocation2] sm:$0xff] 0.0
        %259 = vst [vmem:[#allocation2 + $0x8] sm:$0xff] 0.0
        %260 = vst [vmem:[#allocation3] sm:$0xff] 0
        %261 = vst [vmem:[#allocation3 + $0x8] sm:$0xff] 0
      $region32: #{masked_l1_loss.1} parent=27 // pred_fallthru
        _
      %v262 = vld [vmem:[%s243] sm:$0xff]
      %v263 = vld [vmem:[%s243 + $0x8] sm:$0xff]
      %v264 = vld [vmem:[%s231] sm:$0xff]
      %v265 = vld [vmem:[%s231 + $0x8] sm:$0xff]
      %s266 = sadd.s32 %s19, %s20
      %s267 = smul.u32 %s266, 16
      %v268 = vlaneseq
      %v269 = vshrl.u32 %v268, 7
      %v270 = vadd.s32 %v269, 8
      %v271 = vstv %s267
      %v272 = vadd.s32 %v271, %v269
      %v273 = vadd.s32 %v271, %v270
      %vm274 = vcmp.gt.f32.partialorder %v262, 0.0
      %vm275 = vcmp.gt.f32.partialorder %v263, 0.0
      %vm276 = vcmp.lt.s32.totalorder %v272, 16
      %vm277 = vcmp.lt.s32.totalorder %v273, 16
      %vm278 = vmand %vm274, %vm276
      %vm279 = vmand %vm275, %vm277
      %v280 = vld [vmem:[#allocation2] sm:$0xff]
      %v281 = vld [vmem:[#allocation2 + $0x8] sm:$0xff]
      %v282 = vsub.f32 %v262, %v264
      %v283 = vsub.f32 %v263, %v265
      %v284 = vand.u32 2147483647, %v282
      %v285 = vand.u32 2147483647, %v283
      %v286 = vsel %vm278, %v284, 0.0
      %v287 = vsel %vm279, %v285, 0.0
      %v288 = vadd.f32 %v280, %v286
      %v289 = vadd.f32 %v281, %v287
      %290 = vst [vmem:[#allocation2] sm:$0xff] %v288
      %291 = vst [vmem:[#allocation2 + $0x8] sm:$0xff] %v289
      %v292 = vld [vmem:[#allocation3] sm:$0xff]
      %v293 = vld [vmem:[#allocation3 + $0x8] sm:$0xff]
      %v294 = vsel %vm278, 1, 0
      %v295 = vsel %vm279, 1, 0
      %v296 = vadd.s32 %v292, %v294
      %v297 = vadd.s32 %v293, %v295
      %298 = vst [vmem:[#allocation3] sm:$0xff] %v296
      %299 = vst [vmem:[#allocation3 + $0x8] sm:$0xff] %v297
      // Predicated region
      $region33: #{masked_l1_loss.1} parent=27 // pred_check
        %p300 = pneg %p254
      $region34: #{masked_l1_loss.1} parent=27 // pred_check_branch
        %302 = sbr.rel (%p300) target = $region36
      $region35: #{masked_l1_loss.1} parent=27 // pred_region
        %v303 = vld [vmem:[#allocation2] sm:$0xff]
        %v304 = vld [vmem:[#allocation2 + $0x8] sm:$0xff]
        %v305 = vadd.f32 %v303, %v304
        %306 = vadd.xlane.f32.xlu0 %v305
        %v307 = vpop.xlane.xlu0 %306
        %v308 = vrot.slane %v307, 4
        %v309 = vadd.f32 %v307, %v308
        %v310 = vrot.slane %v309, 2
        %v311 = vadd.f32 %v309, %v310
        %v312 = vrot.slane %v311, 1
        %v313 = vadd.f32 %v311, %v312
        %s314 = vtos %v313
        %v315 = vstv %s314
        %vm316 = vcmask 0
        %317 = vst.msk [vmem:[%s250] sm:$0x1] %vm316, %v315
        %v318 = vld [vmem:[#allocation3] sm:$0xff]
        %v319 = vld [vmem:[#allocation3 + $0x8] sm:$0xff]
        %v320 = vcvt.s32.f32 %v318
        %v321 = vcvt.s32.f32 %v319
        %v322 = vadd.f32 %v320, %v321
        %323 = vadd.xlane.f32.xlu0 %v322
        %v324 = vpop.xlane.xlu0 %323
        %v325 = vrot.slane %v324, 4
        %v326 = vadd.f32 %v324, %v325
        %v327 = vrot.slane %v326, 2
        %v328 = vadd.f32 %v326, %v327
        %v329 = vrot.slane %v328, 1
        %v330 = vadd.f32 %v328, %v329
        %s331 = vtos %v330
        %v332 = vstv %s331
        %333 = vst.msk [vmem:[%s253] sm:$0x1] %vm316, %v332
      $region36: #{masked_l1_loss.1} parent=27 // pred_fallthru
        _
      %p334 = scmp.lt.s32.totalorder %s19, 1
      %s335 = scalar_select %p334, %s19, 1
      %s336 = scalar_lea.vmem %s2, %s335
      %p337 = scmp.lt.s32.totalorder %s19, 1
      %s338 = scalar_select %p337, %s19, 1
      %s339 = scalar_lea.vmem %s3, %s338
      // Predicated region
      $region37: #{masked_l1_loss.1} parent=27 // pred_check
        %p340 = pneg %p109
      $region38: #{masked_l1_loss.1} parent=27 // pred_check_branch
        %342 = sbr.rel (%p340) target = $region40
      $region39: #{masked_l1_loss.1} parent=27 // pred_region
        _
      $region40: #{masked_l1_loss.1} parent=27 // pred_fallthru
        _
      // Predicated region
      $region41: #{masked_l1_loss.1} parent=27 // pred_check
        %p343 = pneg %p135
      $region42: #{masked_l1_loss.1} parent=27 // pred_check_branch
        %345 = sbr.rel (%p343) target = $region44
      $region43: #{masked_l1_loss.1} parent=27 // pred_region
        _
      $region44: #{masked_l1_loss.1} parent=27 // pred_fallthru
        _
    $region28: #{masked_l1_loss.1} parent=5 // pred_fallthru
      _
    %p346 = scmp.le.s32.totalorder 2, %s10
    // Predicated region
    $region45: #{masked_l1_loss.1} parent=5 // pred_check
      %p347 = pneg %p346
    $region46: #{masked_l1_loss.1} parent=5 // pred_check_branch
      %349 = sbr.rel (%p347) target = $region48
    $region47: #{masked_l1_loss.1} parent=5 // pred_region
      %s350 = ssub.s32 %s10, 2
      // Predicated region
      $region49: #{masked_l1_loss.1} parent=47 // pred_check
        %p351 = pneg %p115
      $region50: #{masked_l1_loss.1} parent=47 // pred_check_branch
        %353 = sbr.rel (%p351) target = $region52
      $region51: #{masked_l1_loss.1} parent=47 // pred_region
        %p354 = scmp.lt.s32.totalorder %s21, 1
        %s355 = scalar_select %p354, %s21, 1
        %s356 = scalar_lea.vmem %s2, %s355
      $region52: #{masked_l1_loss.1} parent=47 // pred_fallthru
        _
      // Predicated region
      $region53: #{masked_l1_loss.1} parent=47 // pred_check
        %p357 = pneg %p141
      $region54: #{masked_l1_loss.1} parent=47 // pred_check_branch
        %359 = sbr.rel (%p357) target = $region56
      $region55: #{masked_l1_loss.1} parent=47 // pred_region
        %p360 = scmp.lt.s32.totalorder %s21, 1
        %s361 = scalar_select %p360, %s21, 1
        %s362 = scalar_lea.vmem %s3, %s361
      $region56: #{masked_l1_loss.1} parent=47 // pred_fallthru
        _
    $region48: #{masked_l1_loss.1} parent=5 // pred_fallthru
      _
  $region6: #{masked_l1_loss.1} parent=0 // loop_footer
    %s14 = sadd.s32 1, %s10
  $region7: #{masked_l1_loss.1} parent=0 // loop_footer_branch
    %9 = sbr.rel target = $region3
  $region8: #{masked_l1_loss.1} parent=0 // loop_exit
    _

</llo_original>
